<compile_context>
chip_gen: v6e
topology: v6e:2x2x1
jax: 0.10.0
libtpu: 0.0.40
codegen_flags: <defaults>
</compile_context>

<pallas_src>
import math

import jax
import jax.numpy as jnp
from jax.experimental import pallas as pl
from jax.experimental.pallas import tpu as pltpu

_TWO_PI = 2.0 * math.pi


def _posemb_kernel(x_ref, coef_ref, o_ref):
    # x_ref:    (tile_rows, 1)  f32   timesteps, batch on sublanes
    # coef_ref: (3, W)          f32   rows = [freq_vec, phase_vec, x_onehot]
    # o_ref:    (tile_rows, W)  f32   W = 1 + 2*half_dim, final layout
    x = x_ref[...]                                            # (R, 1)
    t = (x * _TWO_PI) * coef_ref[0:1, :] + coef_ref[1:2, :]   # (R, W)
    # col 0: t == 0 -> sin == 0, then + x * 1 == x   (exact passthrough)
    # cols 1..h:   sin(2*pi*x*w)
    # cols h+1..:  sin(2*pi*x*w + pi/2) == cos(2*pi*x*w)
    o_ref[...] = jnp.sin(t) + x * coef_ref[2:3, :]


def learned_sinusoidal_pos_emb(x, weights, *, max_tile_rows=8192,
                               vmem_budget_bytes=8 << 20):
    """x: (b,) timesteps, weights: (half_dim,) learned parameter.

    Returns (b, 1 + 2*half_dim) = concat([x, sin(2*pi*x*w), cos(2*pi*x*w)], -1),
    matching the PyTorch module's forward.
    """
    b = int(x.shape[0])
    half_dim = int(weights.shape[0])
    out_width = 1 + 2 * half_dim

    w = weights.astype(jnp.float32)
    zero1 = jnp.zeros((1,), jnp.float32)
    coef = jnp.stack([
        jnp.concatenate([zero1, w, w]),                                   # freq_vec
        jnp.concatenate([jnp.zeros((1 + half_dim,), jnp.float32),
                         jnp.full((half_dim,), 0.5 * math.pi, jnp.float32)]),  # phase
        jnp.concatenate([jnp.ones((1,), jnp.float32),
                         jnp.zeros((2 * half_dim,), jnp.float32)]),        # onehot
    ])                                                                    # (3, W)

    x_col = x.astype(jnp.float32).reshape(b, 1)

    # --- batch (sublane) tiling --------------------------------------------
    # Per-row VMEM cost: x tile (lane-padded to 128) + out tile (lane-padded),
    # each double-buffered by the BlockSpec pipeline.
    lanes_out = pl.cdiv(out_width, 128) * 128
    bytes_per_row = 4 * 2 * (128 + lanes_out)
    rows_budget = max(8, (vmem_budget_bytes // bytes_per_row) // 8 * 8)

    rows_needed = pl.cdiv(b, 8) * 8
    tile_rows = int(min(max_tile_rows, rows_budget, rows_needed))
    # Keep >= 2 blocks when there is enough work so the "parallel" grid axis
    # shards across both TensorCores on v7x.
    if pl.cdiv(b, tile_rows) < 2 and rows_needed >= 16:
        tile_rows = int(pl.cdiv(pl.cdiv(rows_needed, 2), 8) * 8)
    tile_rows = max(8, tile_rows)
    n_blocks = int(pl.cdiv(b, tile_rows))

    return pl.pallas_call(
        _posemb_kernel,
        out_shape=jax.ShapeDtypeStruct((b, out_width), jnp.float32),
        grid=(n_blocks,),
        in_specs=[
            pl.BlockSpec((tile_rows, 1), lambda i: (i, 0)),       # x tile
            pl.BlockSpec((3, out_width), lambda i: (0, 0)),       # coef, resident
        ],
        out_specs=pl.BlockSpec((tile_rows, out_width), lambda i: (i, 0)),
        compiler_params=pltpu.CompilerParams(
            dimension_semantics=("parallel",)),
    )(x_col, coef)


def _reference(x, weights):
    # Straight jnp port of the PyTorch forward.
    x2 = x.reshape(-1, 1).astype(jnp.float32)
    freqs = x2 * weights.reshape(1, -1).astype(jnp.float32) * _TWO_PI
    return jnp.concatenate([x2, jnp.sin(freqs), jnp.cos(freqs)], axis=-1)


if __name__ == "__main__":
    key = jax.random.PRNGKey(0)
    k_x, k_w = jax.random.split(key)

    b = 8
    dim = 16                    # module requires dim % 2 == 0
    half_dim = dim // 2

    # Learned parameter (torch.randn(half_dim) equivalent) and timesteps (b,).
    weights = jax.random.normal(k_w, (half_dim,), dtype=jnp.float32)
    x = jax.random.uniform(k_x, (b,), dtype=jnp.float32) * 100.0

    out = jax.block_until_ready(learned_sinusoidal_pos_emb(x, weights))

    ref = _reference(x, weights)
    assert out.shape == (b, dim + 1), out.shape
    # f32 range reduction + the sin(t + pi/2) == cos(t) identity leave only
    # sub-1e-3 differences at these argument magnitudes.
    assert jnp.allclose(out, ref, atol=1e-2, rtol=1e-3), "mismatch vs reference"

    print("KERNEL_OK")
</pallas_src>

<mosaic_0001>
module attributes {stable_mosaic.version = 11 : i64} {
  func.func @_posemb_kernel(%arg0: i32, %arg1: memref<8x1xf32, #tpu.memory_space<vmem>>, %arg2: memref<3x17xf32, #tpu.memory_space<vmem>>, %arg3: memref<8x17xf32, #tpu.memory_space<vmem>>) attributes {dimension_semantics = [#tpu.dimension_semantics<parallel>], iteration_bounds = array<i64: 1>, scalar_prefetch = 0 : i64, scratch_operands = 0 : i64, tpu.core_type = #tpu.core_type<tc>, window_params = [{transform_indices = @transform_0, window_bounds = array<i64: 8, 1>}, {pipeline_mode = #tpu.pipeline_mode<synchronous>, transform_indices = @transform_1, window_bounds = array<i64: 3, 17>}, {transform_indices = @transform_2, window_bounds = array<i64: 8, 17>}]} {
    %c0 = arith.constant 0 : index
    %c0_0 = arith.constant 0 : index
    %0 = vector.load %arg1[%c0, %c0_0] : memref<8x1xf32, #tpu.memory_space<vmem>>, vector<8x1xf32>
    %cst = arith.constant 6.28318548 : f32
    %1 = vector.broadcast %cst : f32 to vector<8x1xf32>
    %2 = arith.mulf %0, %1 : vector<8x1xf32>
    %c0_1 = arith.constant 0 : index
    %c0_2 = arith.constant 0 : index
    %3 = vector.load %arg2[%c0_1, %c0_2] : memref<3x17xf32, #tpu.memory_space<vmem>>, vector<1x17xf32>
    %4 = vector.broadcast %2 : vector<8x1xf32> to vector<8x17xf32>
    %5 = vector.broadcast %3 : vector<1x17xf32> to vector<8x17xf32>
    %6 = arith.mulf %4, %5 : vector<8x17xf32>
    %c1 = arith.constant 1 : index
    %c0_3 = arith.constant 0 : index
    %7 = vector.load %arg2[%c1, %c0_3] : memref<3x17xf32, #tpu.memory_space<vmem>>, vector<1x17xf32>
    %8 = vector.broadcast %7 : vector<1x17xf32> to vector<8x17xf32>
    %9 = arith.addf %6, %8 : vector<8x17xf32>
    %10 = math.sin %9 : vector<8x17xf32>
    %c2 = arith.constant 2 : index
    %c0_4 = arith.constant 0 : index
    %11 = vector.load %arg2[%c2, %c0_4] : memref<3x17xf32, #tpu.memory_space<vmem>>, vector<1x17xf32>
    %12 = vector.broadcast %0 : vector<8x1xf32> to vector<8x17xf32>
    %13 = vector.broadcast %11 : vector<1x17xf32> to vector<8x17xf32>
    %14 = arith.mulf %12, %13 : vector<8x17xf32>
    %15 = arith.addf %10, %14 : vector<8x17xf32>
    %c0_5 = arith.constant 0 : index
    %c0_6 = arith.constant 0 : index
    %16 = vector.load %arg3[%c0_5, %c0_6] : memref<8x17xf32, #tpu.memory_space<vmem>>, vector<8x17xf32>
    tpu.vector_store %arg3[%c0_5, %c0_6], %15 {strides = array<i32>} : memref<8x17xf32, #tpu.memory_space<vmem>>, vector<8x17xf32>,
    return
  }
  func.func @transform_0(%arg0: i32) -> (i32, i32) {
    %c0_i32 = arith.constant 0 : i32
    %c0_i32_0 = arith.constant 0 : i32
    return %arg0, %c0_i32 : i32, i32
  }
  func.func @transform_1(%arg0: i32) -> (i32, i32) {
    %c0_i32 = arith.constant 0 : i32
    %c0_i32_0 = arith.constant 0 : i32
    %c0_i32_1 = arith.constant 0 : i32
    return %c0_i32, %c0_i32_0 : i32, i32
  }
  func.func @transform_2(%arg0: i32) -> (i32, i32) {
    %c0_i32 = arith.constant 0 : i32
    %c0_i32_0 = arith.constant 0 : i32
    return %arg0, %c0_i32 : i32, i32
  }
}

</mosaic_0001>

<llo_original>
// kernel: tpu_custom_call.1
$region0: #{tpu_custom_call.1}
  #allocation0 [shape = 'u32[]', space=smem, size = 0x4, offset = 0x4, fixed_abs, tag = 'smem constant byte address 0x4 - core index']
  #allocation1 [shape = 'u32[144,128]{1,0:T(1,128)}', space=vmem, size = 0x12000, scoped, tag = 'internal scratch']
  %s0 = inlined_call_operand.vmem [shape: f32[8,1], index: 0, kind: input, shape index: {}]
  %s1 = inlined_call_operand.vmem [shape: f32[3,17], index: 1, kind: input, shape index: {}]
  %s2 = inlined_call_operand.hbm [shape: f32[8,17], index: 2, kind: output, shape index: {}]
  %s3 = sld [smem:[#allocation0]]
  $region18: #{tpu_custom_call.1} parent=0
    _
  %s5 = ssub.s32 1, %s3
  %s6 = scalar_select 0, %s5, %s3
  $region1: #{tpu_custom_call.1} parent=0
    #allocation2 [shape = 'u8[4096]{0}', space=vmem, size = 0x1000, scoped, tag = 'output window, operand 0, single buffered']
    #allocation3 [shape = 's32[1]{0}', space=sflag, size = 0x4, scoped, tag = 'scoped memory for tpu_custom_call.1']
    %7 = vsyncpa [#allocation3], 0
    // Predicated region
    $region2: #{tpu_custom_call.1} parent=1 // pred_check
      _
    $region3: #{tpu_custom_call.1} parent=1 // pred_check_branch
      %9 = sbr.rel (0) target = $region5
    $region4: #{tpu_custom_call.1} parent=1 // pred_region
      _
    $region5: #{tpu_custom_call.1} parent=1 // pred_fallthru
      _
    // Predicated region
    $region6: #{tpu_custom_call.1} parent=1 // pred_check
      _
    $region7: #{tpu_custom_call.1} parent=1 // pred_check_branch
      %11 = sbr.rel (0) target = $region9
    $region8: #{tpu_custom_call.1} parent=1 // pred_region
      _
    $region9: #{tpu_custom_call.1} parent=1 // pred_fallthru
      _
    %v12 = vld [vmem:[%s0] sm:$0xff]
    %v13 = vmul.f32 %v12, 6.2831855
    %v14 = vld [vmem:[%s1] sm:$0x1]
    %16 = vset.pattern.permute.xlu0 0
    %17 = vperm.xlu0 %16, %v13
    %v18 = vpop.permute.xlu0 %17
    %v20 = vlaneseq
    %v21 = vshrl.u32 %v20, 7
    %v22 = vsub.s32 0, %v21
    %v23 = vrot.slane %v14, %v22
    %v24 = vmul.f32 %v18, %v23
    %v25 = vld [vmem:[%s1 + $0x1] sm:$0x1]
    %v26 = vlaneseq
    %v27 = vshrl.u32 %v26, 7
    %v28 = vsub.s32 0, %v27
    %v29 = vrot.slane %v25, %v28
    %v30 = vadd.f32 %v24, %v29
    %v31 = vand.u32 2147483647, %v30
    %vm32 = vcmp.le.f32.partialorder %v31, 0.7853982
    %vm33 = vcmp.lt.s32.totalorder %v30, 0
    %v34 = vand.u32 %v30, 2139095040
    %v35 = vshrl.u32 %v34, 23
    %v36 = vsub.s32 %v35, 127
    %v37 = vand.u32 2147483647, %v30
    %v38 = vand.u32 %v37, 8388607
    %v39 = vor.u32 %v38, 8388608
    %v40 = vsub.s32 0, %v39
    %v41 = vadd.s32 %v36, 1
    %vm42 = vcmp.gt.s32.totalorder %v41, 0
    %v43 = vsel %vm42, %v41, 0
    %v44 = vshrl.u32 %v43, 5
    %v45 = vand.u32 %v43, 31
    %v46 = vsub.s32 32, %v45
    %v47 = vshrl.u32 683565275, %v46
    %v48 = vshll.u32 683565275, %v45
    %v49 = vshrl.u32 2475754826, %v46
    %v50 = vor.u32 %v48, %v49
    %v51 = vshll.u32 2475754826, %v45
    %v52 = vshrl.u32 2131351028, %v46
    %v53 = vor.u32 %v51, %v52
    %v54 = vshll.u32 2131351028, %v45
    %v55 = vshrl.u32 2102212464, %v46
    %v56 = vor.u32 %v54, %v55
    %v57 = vshll.u32 2102212464, %v45
    %v58 = vshrl.u32 920167782, %v46
    %v59 = vor.u32 %v57, %v58
    %v60 = vshll.u32 920167782, %v45
    %v61 = vshrl.u32 1326507024, %v46
    %v62 = vor.u32 %v60, %v61
    %vm63 = vcmp.lt.s32.totalorder %v44, 1
    %vm64 = vcmp.lt.s32.totalorder %v44, 2
    %vm65 = vcmp.lt.s32.totalorder %v44, 3
    %vm66 = vcmp.lt.s32.totalorder %v44, 4
    %v67 = vsel %vm63, %v47, %v50
    %v68 = vsel %vm66, %v56, 2102212464
    %v69 = vsel %vm65, %v53, %v68
    %v70 = vsel %vm64, %v67, %v69
    %v71 = vsel %vm63, %v50, %v53
    %v72 = vsel %vm66, %v59, 920167782
    %v73 = vsel %vm65, %v56, %v72
    %v74 = vsel %vm64, %v71, %v73
    %v75 = vsel %vm63, %v53, %v56
    %v76 = vsel %vm66, %v62, 1326507024
    %v77 = vsel %vm65, %v59, %v76
    %v78 = vsel %vm64, %v75, %v77
    %v79 = vshll.u32 %v39, 8
    %v80 = vmul.u32.u64.compose %v79, %v78
    %v81 = vextract.low.u32 %v80
    %v82 = vextract.high.u32 %v80
    %v83 = vmul.u32.u64.compose %v79, %v74
    %v84 = vextract.low.u32 %v83
    %v85 = vextract.high.u32 %v83
    %v86 = vmul.u32 %v79, %v70
    %v87 = vadd.s32 %v82, %v84
    %vm88 = vc.u32 %v82, %v84
    %v89 = vadd.s32 %v85, 1
    %v90 = vsel %vm88, %v89, %v85
    %v91 = vadd.s32 %v86, %v90
    %v92 = vadd.s32 %v91, 536870912
    %v93 = vshrl.u32 %v92, 30
    %v94 = vshll.u32 %v93, 30
    %v95 = vsub.s32 %v91, %v94
    %vm96 = vcmp.lt.s32.totalorder %v95, 0
    %v97 = vsub.s32 0, %v95
    %v98 = vsel %vm96, %v97, %v95
    %v99 = vclz %v98
    %v100 = vsub.s32 %v99, 2
    %vm101 = vcmp.gt.s32.totalorder 0, %v100
    %v102 = vsel %vm101, 0, %v100
    %v103 = vsub.s32 32, %v102
    %v104 = vshll.u32 %v95, %v102
    %v105 = vshrl.u32 %v87, %v103
    %v106 = vor.u32 %v104, %v105
    %v107 = vsub.s32 4294967266, %v102
    %v108 = vadd.s32 %v107, 127
    %v109 = vshll.u32 %v108, 23
    %v110 = vor.u32 4788187, %v109
    %v111 = vand.u32 2147483647, %v110
    %v113 = vcvt.s32.f32 %v106
    %v114 = vmul.f32 %v113, %v111
    %v115 = vxor.u32 %v114, 2147483648
    %v116 = vsel %vm33, %v115, %v114
    %v117 = vsub.s32 4, %v93
    %v118 = vsel %vm33, %v117, %v93
    %v119 = vsel %vm32, %v30, %v116
    %v120 = vsel %vm32, 0, %v118
    %v121 = vcosq.f32.pop %v119
    %v122 = vsinq.f32.pop %v119
    %vm123 = vweird.f32 %v30
    %v124 = vadd.s32 %v120, 3
    %v125 = vand.u32 %v124, 3
    %vm126 = vcmp.lt.s32.totalorder %v125, 2
    %vm127 = vcmp.eq.s32.totalorder %v125, 0
    %v128 = vxor.u32 %v122, 2147483648
    %v129 = vsel %vm127, %v121, %v128
    %vm130 = vcmp.eq.s32.totalorder %v125, 2
    %v131 = vxor.u32 %v121, 2147483648
    %v132 = vsel %vm130, %v131, %v122
    %v133 = vsel %vm126, %v129, %v132
    %v134 = vsel %vm123, nan, %v133
    %v135 = vld [vmem:[%s1 + $0x2] sm:$0x1]
    %137 = vset.pattern.permute.xlu0 0
    %138 = vperm.xlu0 %137, %v12
    %v139 = vpop.permute.xlu0 %138
    %v141 = vlaneseq
    %v142 = vshrl.u32 %v141, 7
    %v143 = vsub.s32 0, %v142
    %v144 = vrot.slane %v135, %v143
    %v145 = vmul.f32 %v139, %v144
    %v146 = vadd.f32 %v134, %v145
    %vm147 = vcmask 138240
    %148 = vst.msk [vmem:[#allocation2] sm:$0xff] %vm147, %v146
    // Predicated region
    $region10: #{tpu_custom_call.1} parent=1 // pred_check
      _
    $region11: #{tpu_custom_call.1} parent=1 // pred_check_branch
      %150 = sbr.rel (0) target = $region13
    $region12: #{tpu_custom_call.1} parent=1 // pred_region
      %s152 = ssub.s32 128, 128
      %153 = vsyncadd [#allocation3], %s152
      %s155 = sshll.u32 [#allocation2], 4
      %s156 = int_to_ptr.vmem [resolvable:$true] %s155
      %158 = dma.vmem_to_hbm [thread:$0]  %s156, 128, %s2, [#allocation3]
    $region13: #{tpu_custom_call.1} parent=1 // pred_fallthru
      _
    // Predicated region
    $region14: #{tpu_custom_call.1} parent=1 // pred_check
      _
    $region15: #{tpu_custom_call.1} parent=1 // pred_check_branch
      %160 = sbr.rel (0) target = $region17
    $region16: #{tpu_custom_call.1} parent=1 // pred_region
      %161 = dma.done [#allocation3], 128
    $region17: #{tpu_custom_call.1} parent=1 // pred_fallthru
      _
    %162 = vsyncpa [#allocation3], 1

</llo_original>
